<compile_context>
chip_gen: v6e
topology: v6e:2x2x1
jax: 0.10.0
libtpu: 0.0.40
codegen_flags: <defaults>
</compile_context>

<pallas_src>
import functools

import jax
import jax.numpy as jnp
from jax.experimental import pallas as pl
from jax.experimental.pallas import tpu as pltpu

_LANE = 128
_NEG = -1e30  # bias fill for padded class lanes (exp -> 0 in the log-softmax)


def _round_up(x, m):
    return (x + m - 1) // m * m


def _halo_sizes(concat):
    mid = concat // 2
    halo = 2 * mid                      # extra rows needed around a time tile
    halo_pad = _round_up(halo, 8)       # keep halo loads sublane-aligned sizes
    return mid, halo, halo_pad


def _choose_tile_t(T, max_tile=512):
    """Time (row) tile: multiple of 8, as large as possible (<=512).

    512 is a multiple of 256 (v6e/v7x MXU pass) and 128 (v5e). For long
    sequences the tile is 128-aligned and near waste-free; the grid keeps a
    batch axis so v7x megacore can still shard work across its 2 TensorCores.
    """
    T8 = _round_up(max(T, 8), 8)
    if T8 <= max_tile:
        tile = T8
    else:
        nt = -(-T8 // max_tile)
        tile = _round_up(-(-T8 // nt), 128)
    t_pad = _round_up(T8, tile)
    return tile, t_pad


# -----------------------------------------------------------------------------
# Pallas kernel: in-register concat window + Linear stack (+ ReLU) + LogSoftmax.
# -----------------------------------------------------------------------------
def _make_mlp_logsoftmax_kernel(num_layers, use_relu, concat, tile_t):
    _, halo, halo_pad = _halo_sizes(concat)

    def kernel(*refs):
        x_ref = refs[0]            # (t_pad + halo_pad, D) bf16, whole (padded) sequence
        out_ref = refs[-1]         # (tile_t, C_pad) f32
        wb_refs = refs[1:-1]       # (w0, b0, w1, b1, ...): w bf16, b f32

        ti = pl.program_id(1)
        row0 = pl.multiple_of(ti * tile_t, 8)
        # Aligned halo load: rows [row0, row0 + tile_t + halo_pad).
        xh = x_ref[pl.ds(row0, tile_t + halo_pad), :]                 # bf16

        # Context window: copy c at output row t is padded row (t + halo - c).
        # Built in-register (lane concat of shifted views) -> the concat*D
        # feature tensor is never written to HBM.
        parts = [xh[halo - c: halo - c + tile_t, :] for c in range(concat)]
        h = parts[0] if concat == 1 else jnp.concatenate(parts, axis=-1)

        for i in range(num_layers):
            w = wb_refs[2 * i][...]                                   # (d_in, d_out) bf16
            b = wb_refs[2 * i + 1][...]                               # (1, d_out)  f32
            # bf16 x bf16 MXU matmul, f32 accumulation.
            h = jnp.dot(h.astype(jnp.bfloat16), w,
                        preferred_element_type=jnp.float32) + b
            if use_relu and i + 1 < num_layers:
                # TODO(synk): nn.Dropout between layers is identity in eval
                # mode; training-mode dropout is not modeled here.
                h = jnp.maximum(h, 0.0)

        # Numerically-stable LogSoftmax over the (128-padded) class lanes.
        # Padded lanes hold a -1e30 bias, so they contribute exp(.) == 0.
        m = jnp.max(h, axis=-1, keepdims=True)
        s = h - m
        lse = jnp.log(jnp.sum(jnp.exp(s), axis=-1, keepdims=True))
        out_ref[...] = (s - lse).astype(out_ref.dtype)

    return kernel


def mlp_logsoftmax_pallas(x_pad, weights, biases, *, concat, tile_t, t_pad, use_relu):
    """x_pad: [B, t_pad + halo_pad, D] bf16 (edge-replicated in time).
    weights[i]: bf16 [d_in, d_out] with hidden/class dims lane-padded to 128.
    Returns [B, t_pad, C_pad] f32 log-probs (padded rows/lanes are garbage)."""
    B, tp2, D = x_pad.shape
    _, _, halo_pad = _halo_sizes(concat)
    assert tp2 == t_pad + halo_pad and t_pad % tile_t == 0
    nt = t_pad // tile_t
    c_pad = weights[-1].shape[1]
    num_layers = len(weights)

    args = [x_pad]
    # The whole (small) padded sequence of one batch stays resident in VMEM
    # across the time-tile axis (index_map constant in `t`).
    # TODO(synk): for very long sequences, tile the sequence with explicit
    # halo DMAs instead of keeping the full per-batch block resident.
    in_specs = [pl.BlockSpec((None, tp2, D), lambda bi, ti: (bi, 0, 0))]
    for w, b in zip(weights, biases):
        args += [w, b]
        # Parameters: full-array blocks with constant index_map (fetched once).
        # TODO(synk): on v7x consider pipeline_mode=pl.Buffered(1) here to halve
        # the resident-weight VMEM footprint (blocks never change over the grid).
        in_specs.append(pl.BlockSpec(w.shape, lambda bi, ti: (0, 0)))
        in_specs.append(pl.BlockSpec(b.shape, lambda bi, ti: (0, 0)))

    out_spec = pl.BlockSpec((None, tile_t, c_pad), lambda bi, ti: (bi, ti, 0))

    return pl.pallas_call(
        _make_mlp_logsoftmax_kernel(num_layers, use_relu, concat, tile_t),
        out_shape=jax.ShapeDtypeStruct((B, t_pad, c_pad), jnp.float32),
        grid=(B, nt),
        in_specs=in_specs,
        out_specs=out_spec,
        compiler_params=pltpu.CompilerParams(
            dimension_semantics=("parallel", "parallel"),
            # Explicit scoped-VMEM budget; leaves headroom on v7x's 64 MiB part.
            vmem_limit_bytes=48 * 1024 * 1024,
        ),
    )(*args)


# -----------------------------------------------------------------------------
# Parameter preparation: bf16 weights, lane-padded hidden/class dims.
# -----------------------------------------------------------------------------
def _pad_params_for_kernel(weights, biases):
    """Cast weights to bf16 and pad hidden/class dims to multiples of 128.

    Padded hidden columns get zero weight + zero bias (ReLU(0)=0, and the next
    layer's padded input rows are zero, so real outputs are unchanged). Padded
    class columns get zero weight and a -1e30 bias so the in-kernel
    log-softmax ignores them.
    """
    num_layers = len(weights)
    pw, pb = [], []
    for i, (w, b) in enumerate(zip(weights, biases)):
        d_in, d_out = w.shape
        in_pad = d_in if i == 0 else _round_up(d_in, _LANE)
        out_pad = _round_up(d_out, _LANE)
        wp = jnp.zeros((in_pad, out_pad), jnp.bfloat16)
        wp = wp.at[:d_in, :d_out].set(w.astype(jnp.bfloat16))
        fill = _NEG if i == num_layers - 1 else 0.0
        bp = jnp.full((1, out_pad), fill, jnp.float32)
        bp = bp.at[0, :d_out].set(b.astype(jnp.float32))
        pw.append(wp)
        pb.append(bp)
    return pw, pb


# -----------------------------------------------------------------------------
# JAX glue reproducing the PyTorch forward semantics (eval mode).
# -----------------------------------------------------------------------------
def feedforward_classifier_forward(features, labels, label_mask, params, dconfig):
    """Mirrors FeedForwardClassifier.forward with labels/label_mask provided.

    Returns (loss, prob, correct, valid) — prob are log-probabilities
    (LogSoftmax output), matching the PyTorch module in eval mode.
    """
    B, T, D = features.shape
    concat = dconfig["concat"]
    mid, halo, halo_pad = _halo_sizes(concat)

    # _match_length
    trunc = min(T, labels.shape[-1])
    features = features[:, :trunc, :]
    labels = labels[:, :trunc]
    label_mask = label_mask[:, :trunc]

    tile_t, t_pad = _choose_tile_t(trunc)

    # Edge-replicated time padding (the 'same'-padding roll of the reference)
    # in bf16: ~1x the input bytes instead of a concat*D HBM tensor.
    x = features.astype(jnp.bfloat16)
    front = jnp.repeat(x[:, :1, :], mid, axis=1)
    back = jnp.repeat(x[:, -1:, :], (t_pad - trunc) + mid + (halo_pad - halo), axis=1)
    x_pad = jnp.concatenate([front, x, back], axis=1)        # (B, t_pad + halo_pad, D)

    pw, pb = _pad_params_for_kernel(params["weights"], params["biases"])

    # Hot path in Pallas: concat window + Linear stack + ReLU + LogSoftmax.
    logprob_pad = mlp_logsoftmax_pallas(
        x_pad, pw, pb,
        concat=concat, tile_t=tile_t, t_pad=t_pad,
        use_relu=(not dconfig["linear"]),
    )

    C = params["weights"][-1].shape[1]
    prob = logprob_pad[:, :trunc, :C]                        # (B, trunc, C) log-probs
    logprob2d = prob.reshape(B * trunc, C)

    # CrossEntropyLoss(ignore_index=-100) over logits == NLL on log-probs.
    labels_with_ignore = 100 * (label_mask - 1) + labels * label_mask
    tgt = labels_with_ignore.reshape(-1)
    valid_row = tgt != -100
    safe_tgt = jnp.where(valid_row, tgt, 0)
    nll = -jnp.take_along_axis(logprob2d, safe_tgt[:, None], axis=1)[:, 0]
    n_valid = jnp.maximum(jnp.sum(valid_row.astype(jnp.float32)), 1.0)
    loss = jnp.sum(jnp.where(valid_row, nll, 0.0)) / n_valid

    # _statistic
    correct = jnp.sum(
        (jnp.argmax(prob, axis=-1) == labels).astype(jnp.int32) * label_mask
    )
    valid = jnp.sum(label_mask)
    return loss, prob, correct, valid


# -----------------------------------------------------------------------------
# Deterministic parameter init (nn.Linear shapes; stored transposed: [in, out]).
# -----------------------------------------------------------------------------
def init_params(key, input_dim, class_num, dconfig):
    eff_in = input_dim * dconfig["concat"] if dconfig["concat"] > 1 else input_dim
    num_layers = dconfig["layers"]
    hidden = dconfig["hidden_size"]

    dims = []
    for i in range(num_layers):
        if i == 0 and num_layers == 1:
            dims.append((eff_in, class_num))
        elif i == 0:
            dims.append((eff_in, hidden))
        elif i == num_layers - 1:
            dims.append((hidden, class_num))
        else:
            dims.append((hidden, hidden))

    weights, biases = [], []
    for (fan_in, fan_out) in dims:
        key, kw, kb = jax.random.split(key, 3)
        bound = 1.0 / jnp.sqrt(jnp.float32(fan_in))
        weights.append(
            jax.random.uniform(kw, (fan_in, fan_out), jnp.float32, -bound, bound)
        )
        biases.append(
            jax.random.uniform(kb, (fan_out,), jnp.float32, -bound, bound)
        )
    return {"weights": weights, "biases": biases}


# -----------------------------------------------------------------------------
# Pure-JAX reference (same bf16-in / f32-accumulate numerics) for validation.
# -----------------------------------------------------------------------------
def _reference_logprob(features, params, dconfig):
    concat = dconfig["concat"]
    B, T, D = features.shape
    x = features.astype(jnp.bfloat16)
    if concat > 1:
        mid = concat // 2
        t = jnp.arange(T)
        blocks = []
        for c in range(concat):
            idx = jnp.clip(t - (c - mid), 0, T - 1)
            blocks.append(x[:, idx, :])
        x = jnp.concatenate(blocks, axis=-1)
    h = x
    num_layers = len(params["weights"])
    for i, (w, b) in enumerate(zip(params["weights"], params["biases"])):
        h = jnp.dot(h.astype(jnp.bfloat16).astype(jnp.float32),
                    w.astype(jnp.bfloat16).astype(jnp.float32)) + b
        if (not dconfig["linear"]) and i + 1 < num_layers:
            h = jnp.maximum(h, 0.0)
    return jax.nn.log_softmax(h, axis=-1)


# -----------------------------------------------------------------------------
# Main
# -----------------------------------------------------------------------------
if __name__ == "__main__":
    dconfig = {
        "concat": 3,        # odd, > 1 -> exercises the context-window path
        "linear": False,    # ReLU (+ eval-mode dropout) between layers
        "layers": 2,
        "hidden_size": 32,
        "drop": 0.1,
    }
    input_dim = 32
    class_num = 8
    B, T = 2, 16
    label_len = 20          # longer than T -> exercises _match_length truncation

    key = jax.random.PRNGKey(0)
    k_feat, k_lab, k_mask, k_param = jax.random.split(key, 4)

    features = jax.random.normal(k_feat, (B, T, input_dim), jnp.float32)
    labels = jax.random.randint(k_lab, (B, label_len), 0, class_num, jnp.int32)
    label_mask = (jax.random.uniform(k_mask, (B, label_len)) > 0.2).astype(jnp.int32)

    params = init_params(k_param, input_dim, class_num, dconfig)

    fwd = jax.jit(functools.partial(feedforward_classifier_forward, dconfig=dconfig))
    loss, prob, correct, valid = fwd(features, labels, label_mask, params)
    jax.block_until_ready((loss, prob, correct, valid))

    assert prob.shape == (B, T, class_num)
    # log-probs must exponentiate to a distribution (padded lanes excluded).
    assert bool(jnp.allclose(jnp.exp(prob).sum(-1), 1.0, atol=1e-3))
    # Match the pure-JAX reference with the same bf16/f32 numerics.
    trunc = min(T, label_len)
    ref_prob = _reference_logprob(features[:, :trunc, :], params, dconfig)
    assert bool(jnp.allclose(prob, ref_prob, atol=2e-2, rtol=2e-2))
    assert bool(jnp.isfinite(loss))
    print("KERNEL_OK")
</pallas_src>

<mosaic_0001>
module attributes {stable_mosaic.version = 11 : i64} {
  func.func @kernel(%arg0: i32, %arg1: i32, %arg2: memref<1x24x32xbf16, #tpu.memory_space<vmem>>, %arg3: memref<96x128xbf16, #tpu.memory_space<vmem>>, %arg4: memref<1x128xf32, #tpu.memory_space<vmem>>, %arg5: memref<128x128xbf16, #tpu.memory_space<vmem>>, %arg6: memref<1x128xf32, #tpu.memory_space<vmem>>, %arg7: memref<1x16x128xf32, #tpu.memory_space<vmem>>) attributes {dimension_semantics = [#tpu.dimension_semantics<parallel>, #tpu.dimension_semantics<parallel>], iteration_bounds = array<i64: 2, 1>, scalar_prefetch = 0 : i64, scratch_operands = 0 : i64, tpu.core_type = #tpu.core_type<tc>, window_params = [{transform_indices = @transform_0, window_bounds = array<i64: 1, 24, 32>}, {pipeline_mode = #tpu.pipeline_mode<synchronous>, transform_indices = @transform_1, window_bounds = array<i64: 96, 128>}, {pipeline_mode = #tpu.pipeline_mode<synchronous>, transform_indices = @transform_2, window_bounds = array<i64: 1, 128>}, {pipeline_mode = #tpu.pipeline_mode<synchronous>, transform_indices = @transform_3, window_bounds = array<i64: 128, 128>}, {pipeline_mode = #tpu.pipeline_mode<synchronous>, transform_indices = @transform_4, window_bounds = array<i64: 1, 128>}, {transform_indices = @transform_5, window_bounds = array<i64: 1, 16, 128>}]} {
    %c16_i32 = arith.constant 16 : i32
    %0 = arith.muli %arg1, %c16_i32 : i32
    %1 = tpu.assume_multiple %0, 8 : i32
    %c0 = arith.constant 0 : index
    %2 = arith.index_cast %1 : i32 to index
    %c0_0 = arith.constant 0 : index
    %3 = vector.load %arg2[%c0, %2, %c0_0] : memref<1x24x32xbf16, #tpu.memory_space<vmem>>, vector<1x24x32xbf16>
    %4 = vector.shape_cast %3 : vector<1x24x32xbf16> to vector<24x32xbf16>
    %5 = vector.extract_strided_slice %4 {offsets = [2, 0], sizes = [16, 32], strides = [1, 1]} : vector<24x32xbf16> to vector<16x32xbf16>
    %6 = vector.extract_strided_slice %4 {offsets = [1, 0], sizes = [16, 32], strides = [1, 1]} : vector<24x32xbf16> to vector<16x32xbf16>
    %7 = vector.extract_strided_slice %4 {offsets = [0, 0], sizes = [16, 32], strides = [1, 1]} : vector<24x32xbf16> to vector<16x32xbf16>
    %8 = tpu.concatenate %5, %6, %7 in 1 : vector<16x32xbf16>, vector<16x32xbf16>, vector<16x32xbf16> -> vector<16x96xbf16>
    %c0_1 = arith.constant 0 : index
    %c0_2 = arith.constant 0 : index
    %9 = vector.load %arg3[%c0_1, %c0_2] : memref<96x128xbf16, #tpu.memory_space<vmem>>, vector<96x128xbf16>
    %c0_3 = arith.constant 0 : index
    %c0_4 = arith.constant 0 : index
    %10 = vector.load %arg4[%c0_3, %c0_4] : memref<1x128xf32, #tpu.memory_space<vmem>>, vector<1x128xf32>
    %cst = arith.constant dense<0.000000e+00> : vector<16x128xf32>
    %11 = tpu.matmul %8, %9, %cst {dimension_numbers = #tpu.dot_dimension_numbers<[1], [0], [0], [1], [0, 0, 1, 1], [], []>} : vector<16x96xbf16>, vector<96x128xbf16>, vector<16x128xf32> -> vector<16x128xf32>
    %12 = vector.broadcast %10 : vector<1x128xf32> to vector<16x128xf32>
    %13 = arith.addf %11, %12 : vector<16x128xf32>
    %cst_5 = arith.constant 0.000000e+00 : f32
    %14 = vector.broadcast %cst_5 : f32 to vector<16x128xf32>
    %15 = arith.maximumf %13, %14 : vector<16x128xf32>
    %c0_6 = arith.constant 0 : index
    %c0_7 = arith.constant 0 : index
    %16 = vector.load %arg5[%c0_6, %c0_7] : memref<128x128xbf16, #tpu.memory_space<vmem>>, vector<128x128xbf16>
    %c0_8 = arith.constant 0 : index
    %c0_9 = arith.constant 0 : index
    %17 = vector.load %arg6[%c0_8, %c0_9] : memref<1x128xf32, #tpu.memory_space<vmem>>, vector<1x128xf32>
    %18 = arith.truncf %15 : vector<16x128xf32> to vector<16x128xbf16>
    %cst_10 = arith.constant dense<0.000000e+00> : vector<16x128xf32>
    %19 = tpu.matmul %18, %16, %cst_10 {dimension_numbers = #tpu.dot_dimension_numbers<[1], [0], [0], [1], [0, 0, 1, 1], [], []>} : vector<16x128xbf16>, vector<128x128xbf16>, vector<16x128xf32> -> vector<16x128xf32>
    %20 = vector.broadcast %17 : vector<1x128xf32> to vector<16x128xf32>
    %21 = arith.addf %19, %20 : vector<16x128xf32>
    %cst_11 = arith.constant dense<0xFF800000> : vector<16xf32>
    %22 = vector.multi_reduction <maximumf>, %21, %cst_11 [1] : vector<16x128xf32> to vector<16xf32>
    %23 = vector.shape_cast %22 : vector<16xf32> to vector<16x1xf32>
    %24 = vector.broadcast %23 : vector<16x1xf32> to vector<16x128xf32>
    %25 = arith.subf %21, %24 : vector<16x128xf32>
    %26 = math.exp %25 : vector<16x128xf32>
    %cst_12 = arith.constant dense<0.000000e+00> : vector<16xf32>
    %27 = vector.multi_reduction <add>, %26, %cst_12 [1] : vector<16x128xf32> to vector<16xf32>
    %28 = vector.shape_cast %27 : vector<16xf32> to vector<16x1xf32>
    %29 = math.log %28 : vector<16x1xf32>
    %30 = vector.broadcast %29 : vector<16x1xf32> to vector<16x128xf32>
    %31 = arith.subf %25, %30 : vector<16x128xf32>
    %c0_13 = arith.constant 0 : index
    %c0_14 = arith.constant 0 : index
    %c0_15 = arith.constant 0 : index
    %32 = vector.load %arg7[%c0_13, %c0_14, %c0_15] : memref<1x16x128xf32, #tpu.memory_space<vmem>>, vector<1x16x128xf32>
    %33 = vector.shape_cast %32 : vector<1x16x128xf32> to vector<16x128xf32>
    %34 = vector.shape_cast %31 : vector<16x128xf32> to vector<1x16x128xf32>
    tpu.vector_store %arg7[%c0_13, %c0_14, %c0_15], %34 {strides = array<i32>} : memref<1x16x128xf32, #tpu.memory_space<vmem>>, vector<1x16x128xf32>,
    return
  }
  func.func @transform_0(%arg0: i32, %arg1: i32) -> (i32, i32, i32) {
    %c0_i32 = arith.constant 0 : i32
    %c0_i32_0 = arith.constant 0 : i32
    %c0_i32_1 = arith.constant 0 : i32
    return %arg0, %c0_i32, %c0_i32_0 : i32, i32, i32
  }
  func.func @transform_1(%arg0: i32, %arg1: i32) -> (i32, i32) {
    %c0_i32 = arith.constant 0 : i32
    %c0_i32_0 = arith.constant 0 : i32
    %c0_i32_1 = arith.constant 0 : i32
    return %c0_i32, %c0_i32_0 : i32, i32
  }
  func.func @transform_2(%arg0: i32, %arg1: i32) -> (i32, i32) {
    %c0_i32 = arith.constant 0 : i32
    %c0_i32_0 = arith.constant 0 : i32
    %c0_i32_1 = arith.constant 0 : i32
    return %c0_i32, %c0_i32_0 : i32, i32
  }
  func.func @transform_3(%arg0: i32, %arg1: i32) -> (i32, i32) {
    %c0_i32 = arith.constant 0 : i32
    %c0_i32_0 = arith.constant 0 : i32
    %c0_i32_1 = arith.constant 0 : i32
    return %c0_i32, %c0_i32_0 : i32, i32
  }
  func.func @transform_4(%arg0: i32, %arg1: i32) -> (i32, i32) {
    %c0_i32 = arith.constant 0 : i32
    %c0_i32_0 = arith.constant 0 : i32
    %c0_i32_1 = arith.constant 0 : i32
    return %c0_i32, %c0_i32_0 : i32, i32
  }
  func.func @transform_5(%arg0: i32, %arg1: i32) -> (i32, i32, i32) {
    %c0_i32 = arith.constant 0 : i32
    %c0_i32_0 = arith.constant 0 : i32
    return %arg0, %arg1, %c0_i32 : i32, i32, i32
  }
}

</mosaic_0001>

<llo_original>
// kernel: feedforward_classifier_forward.1
$region0: #{feedforward_classifier_forward.1}
  #allocation0 [shape = 'u32[]', space=smem, size = 0x4, offset = 0x4, fixed_abs, tag = 'smem constant byte address 0x4 - core index']
  #allocation1 [shape = 'u32[144,128]{1,0:T(1,128)}', space=vmem, size = 0x12000, scoped, tag = 'internal scratch']
  %s0 = inlined_call_operand.vmem [shape: bf16[2,24,32], index: 0, kind: input, shape index: {}]
  %s1 = inlined_call_operand.vmem [shape: bf16[96,128], index: 1, kind: input, shape index: {}]
  %s2 = inlined_call_operand.vmem [shape: f32[1,128], index: 2, kind: input, shape index: {}]
  %s3 = inlined_call_operand.vmem [shape: bf16[128,128], index: 3, kind: input, shape index: {}]
  %s4 = inlined_call_operand.vmem [shape: f32[1,128], index: 4, kind: input, shape index: {}]
  %s5 = inlined_call_operand.vmem [shape: f32[2,16,128], index: 5, kind: output, shape index: {}]
  %s6 = sld [smem:[#allocation0]]
  $region53: #{feedforward_classifier_forward.1} parent=0
    _
  %s8 = ssub.s32 1, %s6
  %s9 = scalar_select 0, %s8, %s6
  loop: start=0, step=1, limit=4
  $region2: #{feedforward_classifier_forward.1} parent=0 // loop_pre_header
    _
  $region3: #{feedforward_classifier_forward.1} parent=0 // loop_header
    %s11 = sphi 0, %s15
    %p12 = scmp.ge.s32.totalorder %s11, 4
    %s18 = sphi 0, %s30
    %s19 = sphi 0, %s26
    %s20 = sphi 0, %s18
    %s21 = sphi 0, %s19
    %s22 = sphi 0, %s20
    %s23 = sphi 0, %s21
    %s33 = sphi 0, %s35
    %s36 = sphi 0, %s33
    %s37 = sphi 0, %s36
    %s53 = sphi 0, %s37
    %s57 = sphi 0, %s57
    %s59 = sphi 0, %s57
    %s60 = sphi 0, %s59
    %s74 = sphi 0, %s60
    %s78 = sphi 0, %s78
    %s80 = sphi 0, %s78
    %s81 = sphi 0, %s80
    %s95 = sphi 0, %s81
    %s99 = sphi 0, %s99
    %s101 = sphi 0, %s99
    %s102 = sphi 0, %s101
    %s116 = sphi 0, %s102
    %s120 = sphi 0, %s120
    %s122 = sphi 0, %s120
    %s123 = sphi 0, %s122
    %s137 = sphi 0, %s123
    %s145 = sphi 0, %s147
    %s148 = sphi 0, %s145
    %s149 = sphi 0, %s148
    %s165 = sphi 0, %s149
  $region4: #{feedforward_classifier_forward.1} parent=0 // loop_header_branch
    %14 = sbr.rel (%p12) target = $region8
  $region5: #{feedforward_classifier_forward.1} parent=0 // loop_body
    %s16 = ssub.s32 %s11, 1
    %s17 = ssub.s32 %s11, 2
    %s24 = sadd.s32 1, %s19
    %p25 = scmp.ge.s32.totalorder %s24, 1
    %s26 = scalar_select %p25, 0, %s24
    %s27 = sadd.s32 1, %s18
    %s28 = scalar_select %p25, %s27, %s18
    %p29 = scmp.ge.s32.totalorder %s28, 2
    %s30 = scalar_select %p29, 0, %s28
    %s31 = ssub.s32 %s18, %s30
    %p32 = scmp.eq.s32.totalorder %s31, 0
    %s34 = sadd.s32 %s33, 1
    %s35 = scalar_select %p32, %s33, %s34
    %p38 = pneg %p32
    %p39 = scmp.eq.s32.totalorder %s11, 1
    %p40 = por %p38, %p39
    %p41 = scmp.ne.s32.totalorder %s33, %s36
    %p42 = scmp.eq.s32.totalorder %s11, 0
    %p43 = por %p41, %p42
    %p44 = scmp.ne.s32.totalorder %s33, %s36
    %p45 = scmp.eq.s32.totalorder %s16, 1
    %p46 = por %p44, %p45
    %p47 = scmp.ne.s32.totalorder %s36, %s37
    %p48 = scmp.eq.s32.totalorder %s16, 0
    %p49 = por %p47, %p48
    %p50 = scmp.ne.s32.totalorder %s36, %s37
    %p51 = scmp.eq.s32.totalorder %s17, 1
    %p52 = por %p50, %p51
    %p54 = scmp.ne.s32.totalorder %s37, %s53
    %p55 = scmp.eq.s32.totalorder %s17, 0
    %p56 = por %p54, %p55
    %s58 = sadd.s32 %s57, 1
    %p61 = scmp.eq.s32.totalorder %s11, 1
    %p62 = scmp.ne.s32.totalorder %s57, %s59
    %p63 = scmp.eq.s32.totalorder %s11, 0
    %p64 = por %p62, %p63
    %p65 = scmp.ne.s32.totalorder %s57, %s59
    %p66 = scmp.eq.s32.totalorder %s16, 1
    %p67 = por %p65, %p66
    %p68 = scmp.ne.s32.totalorder %s59, %s60
    %p69 = scmp.eq.s32.totalorder %s16, 0
    %p70 = por %p68, %p69
    %p71 = scmp.ne.s32.totalorder %s59, %s60
    %p72 = scmp.eq.s32.totalorder %s17, 1
    %p73 = por %p71, %p72
    %p75 = scmp.ne.s32.totalorder %s60, %s74
    %p76 = scmp.eq.s32.totalorder %s17, 0
    %p77 = por %p75, %p76
    %s79 = sadd.s32 %s78, 1
    %p82 = scmp.eq.s32.totalorder %s11, 1
    %p83 = scmp.ne.s32.totalorder %s78, %s80
    %p84 = scmp.eq.s32.totalorder %s11, 0
    %p85 = por %p83, %p84
    %p86 = scmp.ne.s32.totalorder %s78, %s80
    %p87 = scmp.eq.s32.totalorder %s16, 1
    %p88 = por %p86, %p87
    %p89 = scmp.ne.s32.totalorder %s80, %s81
    %p90 = scmp.eq.s32.totalorder %s16, 0
    %p91 = por %p89, %p90
    %p92 = scmp.ne.s32.totalorder %s80, %s81
    %p93 = scmp.eq.s32.totalorder %s17, 1
    %p94 = por %p92, %p93
    %p96 = scmp.ne.s32.totalorder %s81, %s95
    %p97 = scmp.eq.s32.totalorder %s17, 0
    %p98 = por %p96, %p97
    %s100 = sadd.s32 %s99, 1
    %p103 = scmp.eq.s32.totalorder %s11, 1
    %p104 = scmp.ne.s32.totalorder %s99, %s101
    %p105 = scmp.eq.s32.totalorder %s11, 0
    %p106 = por %p104, %p105
    %p107 = scmp.ne.s32.totalorder %s99, %s101
    %p108 = scmp.eq.s32.totalorder %s16, 1
    %p109 = por %p107, %p108
    %p110 = scmp.ne.s32.totalorder %s101, %s102
    %p111 = scmp.eq.s32.totalorder %s16, 0
    %p112 = por %p110, %p111
    %p113 = scmp.ne.s32.totalorder %s101, %s102
    %p114 = scmp.eq.s32.totalorder %s17, 1
    %p115 = por %p113, %p114
    %p117 = scmp.ne.s32.totalorder %s102, %s116
    %p118 = scmp.eq.s32.totalorder %s17, 0
    %p119 = por %p117, %p118
    %s121 = sadd.s32 %s120, 1
    %p124 = scmp.eq.s32.totalorder %s11, 1
    %p125 = scmp.ne.s32.totalorder %s120, %s122
    %p126 = scmp.eq.s32.totalorder %s11, 0
    %p127 = por %p125, %p126
    %p128 = scmp.ne.s32.totalorder %s120, %s122
    %p129 = scmp.eq.s32.totalorder %s16, 1
    %p130 = por %p128, %p129
    %p131 = scmp.ne.s32.totalorder %s122, %s123
    %p132 = scmp.eq.s32.totalorder %s16, 0
    %p133 = por %p131, %p132
    %p134 = scmp.ne.s32.totalorder %s122, %s123
    %p135 = scmp.eq.s32.totalorder %s17, 1
    %p136 = por %p134, %p135
    %p138 = scmp.ne.s32.totalorder %s123, %s137
    %p139 = scmp.eq.s32.totalorder %s17, 0
    %p140 = por %p138, %p139
    %s141 = ssub.s32 %s18, %s30
    %s142 = ssub.s32 %s19, %s26
    %s143 = sor.u32 %s141, %s142
    %p144 = scmp.eq.s32.totalorder %s143, 0
    %s146 = sadd.s32 %s145, 1
    %s147 = scalar_select %p144, %s145, %s146
    %p150 = pneg %p144
    %p151 = scmp.eq.s32.totalorder %s11, 1
    %p152 = por %p150, %p151
    %p153 = scmp.ne.s32.totalorder %s145, %s148
    %p154 = scmp.eq.s32.totalorder %s11, 0
    %p155 = por %p153, %p154
    %p156 = scmp.ne.s32.totalorder %s145, %s148
    %p157 = scmp.eq.s32.totalorder %s16, 1
    %p158 = por %p156, %p157
    %p159 = scmp.ne.s32.totalorder %s148, %s149
    %p160 = scmp.eq.s32.totalorder %s16, 0
    %p161 = por %p159, %p160
    %p162 = scmp.ne.s32.totalorder %s148, %s149
    %p163 = scmp.eq.s32.totalorder %s17, 1
    %p164 = por %p162, %p163
    %p166 = scmp.ne.s32.totalorder %s149, %s165
    %p167 = scmp.eq.s32.totalorder %s17, 0
    %p168 = por %p166, %p167
    %p169 = scmp.le.s32.totalorder 1, %s11
    %p170 = scmp.lt.s32.totalorder %s11, 3
    %p171 = pnand %p169, %p170
    %p172 = pneg %p171
    // Predicated region
    $region9: #{feedforward_classifier_forward.1} parent=5 // pred_check
      _
    $region10: #{feedforward_classifier_forward.1} parent=5 // pred_check_branch
      %174 = sbr.rel (%p171) target = $region12
    $region11: #{feedforward_classifier_forward.1} parent=5 // pred_region
      %s175 = ssub.s32 %s11, 1
      // Predicated region
      $region13: #{feedforward_classifier_forward.1} parent=11 // pred_check
        %p176 = pneg %p70
      $region14: #{feedforward_classifier_forward.1} parent=11 // pred_check_branch
        %178 = sbr.rel (%p176) target = $region16
      $region15: #{feedforward_classifier_forward.1} parent=11 // pred_region
        _
      $region16: #{feedforward_classifier_forward.1} parent=11 // pred_fallthru
        _
      // Predicated region
      $region17: #{feedforward_classifier_forward.1} parent=11 // pred_check
        %p179 = pneg %p91
      $region18: #{feedforward_classifier_forward.1} parent=11 // pred_check_branch
        %181 = sbr.rel (%p179) target = $region20
      $region19: #{feedforward_classifier_forward.1} parent=11 // pred_region
        _
      $region20: #{feedforward_classifier_forward.1} parent=11 // pred_fallthru
        _
      // Predicated region
      $region21: #{feedforward_classifier_forward.1} parent=11 // pred_check
        %p182 = pneg %p112
      $region22: #{feedforward_classifier_forward.1} parent=11 // pred_check_branch
        %184 = sbr.rel (%p182) target = $region24
      $region23: #{feedforward_classifier_forward.1} parent=11 // pred_region
        _
      $region24: #{feedforward_classifier_forward.1} parent=11 // pred_fallthru
        _
      // Predicated region
      $region25: #{feedforward_classifier_forward.1} parent=11 // pred_check
        %p185 = pneg %p133
      $region26: #{feedforward_classifier_forward.1} parent=11 // pred_check_branch
        %187 = sbr.rel (%p185) target = $region28
      $region27: #{feedforward_classifier_forward.1} parent=11 // pred_region
        _
      $region28: #{feedforward_classifier_forward.1} parent=11 // pred_fallthru
        _
    $region12: #{feedforward_classifier_forward.1} parent=5 // pred_fallthru
      _
    %p188 = scmp.lt.s32.totalorder %s11, 2
    // Predicated region
    $region29: #{feedforward_classifier_forward.1} parent=5 // pred_check
      %p189 = pneg %p188
    $region30: #{feedforward_classifier_forward.1} parent=5 // pred_check_branch
      %191 = sbr.rel (%p189) target = $region32
    $region31: #{feedforward_classifier_forward.1} parent=5 // pred_region
      // Predicated region
      $region33: #{feedforward_classifier_forward.1} parent=31 // pred_check
        %p192 = pneg %p43
      $region34: #{feedforward_classifier_forward.1} parent=31 // pred_check_branch
        %194 = sbr.rel (%p192) target = $region36
      $region35: #{feedforward_classifier_forward.1} parent=31 // pred_region
        %p195 = scmp.lt.s32.totalorder %s18, 1
        %s196 = scalar_select %p195, %s18, 1
        %s197 = smul.addr %s196, 3
        %s198 = smul.addr %s197, 4
        %s199 = scalar_lea.vmem %s0, %s198
      $region36: #{feedforward_classifier_forward.1} parent=31 // pred_fallthru
        _
    $region32: #{feedforward_classifier_forward.1} parent=5 // pred_fallthru
      _
    %p200 = scmp.le.s32.totalorder 1, %s11
    %p201 = scmp.lt.s32.totalorder %s11, 3
    %p202 = pnand %p200, %p201
    %p203 = pneg %p202
    // Predicated region
    $region37: #{feedforward_classifier_forward.1} parent=5 // pred_check
      _
    $region38: #{feedforward_classifier_forward.1} parent=5 // pred_check_branch
      %205 = sbr.rel (%p202) target = $region40
    $region39: #{feedforward_classifier_forward.1} parent=5 // pred_region
      %s206 = ssub.s32 %s11, 1
      %p207 = scmp.lt.s32.totalorder %s20, 1
      %s208 = scalar_select %p207, %s20, 1
      %s209 = smul.addr %s208, 3
      %s210 = smul.addr %s209, 4
      %s211 = scalar_lea.vmem %s0, %s210
      %p212 = pneg %p49
      %p213 = pneg %p46
      %p214 = pneg %p70
      %p215 = pneg %p67
      %p216 = pneg %p91
      %p217 = pneg %p88
      %p218 = pneg %p112
      %p219 = pneg %p109
      %p220 = pneg %p133
      %p221 = pneg %p130
      %p222 = pneg %p161
      %p223 = pneg %p158
      %s224 = smul.u32 2, %s21
      %p225 = scmp.lt.s32.totalorder %s20, 1
      %s226 = scalar_select %p225, %s20, 1
      %p227 = scmp.lt.s32.totalorder %s224, 1
      %s228 = scalar_select %p227, %s224, 1
      %s229 = smul.addr %s226, 2
      %s230 = sadd.s32 %s228, %s229
      %s231 = smul.addr %s230, 8
      %s232 = scalar_lea.vmem %s5, %s231
      %p233 = scmp.lt.s32.totalorder %s20, 1
      %s234 = scalar_select %p233, %s20, 1
      %s235 = smul.addr %s234, 3
      %s236 = smul.addr %s235, 4
      %s237 = scalar_lea.vmem %s0, %s236
      %s238 = smul.u32 2, %s21
      %p239 = scmp.lt.s32.totalorder %s20, 1
      %s240 = scalar_select %p239, %s20, 1
      %p241 = scmp.lt.s32.totalorder %s238, 1
      %s242 = scalar_select %p241, %s238, 1
      %s243 = smul.addr %s240, 2
      %s244 = sadd.s32 %s242, %s243
      %s245 = smul.addr %s244, 8
      %s246 = scalar_lea.vmem %s5, %s245
      %s247 = smul.u32 2, %s21
      %s249 = smul.u32 %s21, 16
      %s250 = sshra.s32 %s249, 3
      %s251 = sand.u32 %s249, 7
      %s252 = smul.addr %s250, 4
      %s253 = scalar_lea.vmem %s237, %s252
      %v254 = vld [vmem:[%s253] sm:$0xf]
      %v255 = vld [vmem:[%s253 + $0x4] sm:$0xf]
      %v256 = vld [vmem:[%s253 + $0x8] sm:$0xf]
      %v260 = vunpack.c.l.b16 %v254
      %v261 = vunpack.c.l.b16 %v255
      %v262 = vunpack.c.l.b16 %v256
      %v263 = vpack.c.b16 %v261, %v260
      %v264 = vpack.c.b16 %v262, %v262
      %vm265 = vsmask.f32 256
      %v267 = vshrl.u32 %v263, 16
      %v269 = vrot.slane %v267, 7
      %v270 = vshll.u32 %v263, 16
      %v272 = vor.u32 %v269, %v270
      %v274 = vshll.u32 %v264, 16
      %v276 = vsel %vm265, %v269, %v274
      %277 = vrot.lane.b32.xlu0 %v272, 32
      %v278 = vpop.permute.xlu0 %277
      %279 = vrot.lane.b32.xlu0 %v276, 32
      %v280 = vpop.permute.xlu0 %279
      %v281 = vrot.slane %v263, 7
      %282 = vrot.lane.b32.xlu0 %v281, 64
      %v283 = vpop.permute.xlu0 %282
      %vm284 = vcmask 261120
      %v286 = vsel %vm284, %v263, %v278
      %v288 = vsel %vm284, %v264, %v280
      %vm289 = vcmask 523264
      %v291 = vsel %vm289, %v286, %v283
      %v292 = vsel %vm289, %v288, %v283
      %v293 = vld [vmem:[%s1] sm:$0xf]
      %v294 = vld [vmem:[%s1 + $0x4] sm:$0xf]
      %v295 = vld [vmem:[%s1 + $0x8] sm:$0xf]
      %v296 = vld [vmem:[%s1 + $0xc] sm:$0xf]
      %v297 = vld [vmem:[%s1 + $0x10] sm:$0xf]
      %v298 = vld [vmem:[%s1 + $0x14] sm:$0xf]
      %v299 = vld [vmem:[%s1 + $0x18] sm:$0xf]
      %v300 = vld [vmem:[%s1 + $0x1c] sm:$0xf]
      %v301 = vld [vmem:[%s1 + $0x20] sm:$0xf]
      %v302 = vld [vmem:[%s1 + $0x24] sm:$0xf]
      %v303 = vld [vmem:[%s1 + $0x28] sm:$0xf]
      %v304 = vld [vmem:[%s1 + $0x2c] sm:$0xf]
      %v305 = vld [vmem:[%s2] sm:$0x1]
      %v307 = vlaneseq
      %v308 = vshrl.u32 %v307, 7
      %v309 = vsub.s32 0, %v308
      %v310 = vrot.slane %v305, %v309
      %vm314 = vcmask 1046528
      %v315 = vrot.slane %v291, 1
      %v316 = vrot.slane %v292, 1
      %v317 = vsel %vm314, %v315, %v316
      %v330 = vunpack.c.l.b16 %v293
      %v331 = vunpack.c.l.b16 %v294
      %v332 = vunpack.c.l.b16 %v295
      %v333 = vunpack.c.l.b16 %v296
      %v334 = vunpack.c.l.b16 %v297
      %v335 = vunpack.c.l.b16 %v298
      %v336 = vunpack.c.l.b16 %v299
      %v337 = vunpack.c.l.b16 %v300
      %v338 = vunpack.c.l.b16 %v301
      %v339 = vunpack.c.l.b16 %v302
      %v340 = vunpack.c.l.b16 %v303
      %v341 = vunpack.c.l.b16 %v304
      %v342 = vpack.c.b16 %v331, %v330
      %v343 = vpack.c.b16 %v333, %v332
      %v344 = vpack.c.b16 %v335, %v334
      %v345 = vpack.c.b16 %v337, %v336
      %v346 = vpack.c.b16 %v339, %v338
      %v347 = vpack.c.b16 %v341, %v340
      %vm354 = vcmask 785408
      %v356 = vsel %vm354, %v317, 0
      %358 = vmatprep.subr.bf16.mxu0 0
      %359 = vmatpush1.bf16.msra.mxu0 0
      %360 = vmatprep.subr.bf16.mxu0 0
      %361 = vmatpush1.bf16.msra.mxu0 0
      %362 = vmatprep.subr.bf16.mxu0 0
      %363 = vmatpush1.bf16.msra.mxu0 %v347
      %364 = vmatprep.subr.bf16.mxu0 0
      %365 = vmatpush1.bf16.msra.mxu0 %v346
      %366 = vmatprep.subr.bf16.mxu0 0
      %367 = vmatpush1.bf16.msra.mxu0 %v345
      %368 = vmatprep.subr.bf16.mxu0 0
      %369 = vmatpush1.bf16.msra.mxu0 %v344
      %370 = vmatprep.subr.bf16.mxu0 0
      %371 = vmatpush1.bf16.msra.mxu0 %v343
      %372 = vmatprep.subr.bf16.mxu0 0
      %373 = vmatpush1.bf16.msra.mxu0 %v342
      %374 = vmatprep.subr.bf16.mxu0 0
      %375 = vmatpush2.bf16.msra.mxu0 0
      %376 = vmatprep.subr.bf16.mxu0 0
      %377 = vmatpush2.bf16.msra.mxu0 0
      %378 = vmatprep.subr.bf16.mxu0 0
      %379 = vmatpush2.bf16.msra.mxu0 0
      %380 = vmatprep.subr.bf16.mxu0 0
      %381 = vmatpush2.bf16.msra.mxu0 0
      %382 = vmatprep.subr.bf16.mxu0 0
      %383 = vmatpush2.bf16.msra.mxu0 0
      %384 = vmatprep.subr.bf16.mxu0 0
      %385 = vmatpush2.bf16.msra.mxu0 0
      %386 = vmatprep.subr.bf16.mxu0 0
      %387 = vmatpush2.bf16.msra.mxu0 0
      %388 = vmatprep.subr.bf16.mxu0 0
      %389 = vmatpush2.bf16.msra.mxu0 0
      %390 = vmatprep.mubr.bf16.mxu0 0
      %391 = vmatmul.mubr.bf16.gmra.mxu0 %v356
      %v392 = vpop.f32.mrf.mxu0
      %v393 = vadd.f32 %v310, %v392
      %v394 = vpop.f32.mrf.mxu0
      %v395 = vpop.f32.mrf.mxu0
      %v396 = vadd.f32 %v310, %v395
      %v397 = vpop.f32.mrf.mxu0
      %398 = vdwg.mxu0
      %v399 = vmax.f32 %v393, 0.0
      %v400 = vmax.f32 %v396, 0.0
      %v401 = vld [vmem:[%s3] sm:$0xf]
      %v402 = vld [vmem:[%s3 + $0x4] sm:$0xf]
      %v403 = vld [vmem:[%s3 + $0x8] sm:$0xf]
      %v404 = vld [vmem:[%s3 + $0xc] sm:$0xf]
      %v405 = vld [vmem:[%s3 + $0x10] sm:$0xf]
      %v406 = vld [vmem:[%s3 + $0x14] sm:$0xf]
      %v407 = vld [vmem:[%s3 + $0x18] sm:$0xf]
      %v408 = vld [vmem:[%s3 + $0x1c] sm:$0xf]
      %v409 = vld [vmem:[%s3 + $0x20] sm:$0xf]
      %v410 = vld [vmem:[%s3 + $0x24] sm:$0xf]
      %v411 = vld [vmem:[%s3 + $0x28] sm:$0xf]
      %v412 = vld [vmem:[%s3 + $0x2c] sm:$0xf]
      %v413 = vld [vmem:[%s3 + $0x30] sm:$0xf]
      %v414 = vld [vmem:[%s3 + $0x34] sm:$0xf]
      %v415 = vld [vmem:[%s3 + $0x38] sm:$0xf]
      %v416 = vld [vmem:[%s3 + $0x3c] sm:$0xf]
      %v417 = vld [vmem:[%s4] sm:$0x1]
      %v418 = vpack.c.bf16 %v400, %v399
      %v420 = vlaneseq
      %v421 = vshrl.u32 %v420, 7
      %v422 = vsub.s32 0, %v421
      %v423 = vrot.slane %v417, %v422
      %v441 = vunpack.c.l.b16 %v401
      %v442 = vunpack.c.l.b16 %v402
      %v443 = vunpack.c.l.b16 %v403
      %v444 = vunpack.c.l.b16 %v404
      %v445 = vunpack.c.l.b16 %v405
      %v446 = vunpack.c.l.b16 %v406
      %v447 = vunpack.c.l.b16 %v407
      %v448 = vunpack.c.l.b16 %v408
      %v449 = vunpack.c.l.b16 %v409
      %v450 = vunpack.c.l.b16 %v410
      %v451 = vunpack.c.l.b16 %v411
      %v452 = vunpack.c.l.b16 %v412
      %v453 = vunpack.c.l.b16 %v413
      %v454 = vunpack.c.l.b16 %v414
      %v455 = vunpack.c.l.b16 %v415
      %v456 = vunpack.c.l.b16 %v416
      %v457 = vpack.c.b16 %v442, %v441
      %v458 = vpack.c.b16 %v444, %v443
      %v459 = vpack.c.b16 %v446, %v445
      %v460 = vpack.c.b16 %v448, %v447
      %v461 = vpack.c.b16 %v450, %v449
      %v462 = vpack.c.b16 %v452, %v451
      %v463 = vpack.c.b16 %v454, %v453
      %v464 = vpack.c.b16 %v456, %v455
      %473 = vmatprep.subr.bf16.mxu0 0
      %474 = vmatpush1.bf16.msra.mxu0 %v464
      %475 = vmatprep.subr.bf16.mxu0 0
      %476 = vmatpush1.bf16.msra.mxu0 %v463
      %477 = vmatprep.subr.bf16.mxu0 0
      %478 = vmatpush1.bf16.msra.mxu0 %v462
      %479 = vmatprep.subr.bf16.mxu0 0
      %480 = vmatpush1.bf16.msra.mxu0 %v461
      %481 = vmatprep.subr.bf16.mxu0 0
      %482 = vmatpush1.bf16.msra.mxu0 %v460
      %483 = vmatprep.subr.bf16.mxu0 0
      %484 = vmatpush1.bf16.msra.mxu0 %v459
      %485 = vmatprep.subr.bf16.mxu0 0
      %486 = vmatpush1.bf16.msra.mxu0 %v458
      %487 = vmatprep.subr.bf16.mxu0 0
      %488 = vmatpush1.bf16.msra.mxu0 %v457
      %489 = vmatprep.subr.bf16.mxu0 0
      %490 = vmatpush2.bf16.msra.mxu0 0
      %491 = vmatprep.subr.bf16.mxu0 0
      %492 = vmatpush2.bf16.msra.mxu0 0
      %493 = vmatprep.subr.bf16.mxu0 0
      %494 = vmatpush2.bf16.msra.mxu0 0
      %495 = vmatprep.subr.bf16.mxu0 0
      %496 = vmatpush2.bf16.msra.mxu0 0
      %497 = vmatprep.subr.bf16.mxu0 0
      %498 = vmatpush2.bf16.msra.mxu0 0
      %499 = vmatprep.subr.bf16.mxu0 0
      %500 = vmatpush2.bf16.msra.mxu0 0
      %501 = vmatprep.subr.bf16.mxu0 0
      %502 = vmatpush2.bf16.msra.mxu0 0
      %503 = vmatprep.subr.bf16.mxu0 0
      %504 = vmatpush2.bf16.msra.mxu0 0
      %505 = vmatprep.mubr.bf16.mxu0 0
      %506 = vmatmul.mubr.bf16.gmra.mxu0 %v418
      %v507 = vpop.f32.mrf.mxu0
      %v508 = vadd.f32 %v423, %v507
      %v509 = vpop.f32.mrf.mxu0
      %v510 = vpop.f32.mrf.mxu0
      %v511 = vadd.f32 %v423, %v510
      %v512 = vpop.f32.mrf.mxu0
      %513 = vdwg.mxu0
      %514 = vmax.xlane.f32.xlu0 %v508
      %v515 = vpop.xlane.xlu0 %514
      %516 = vmax.xlane.f32.xlu0 %v511
      %v517 = vpop.xlane.xlu0 %516
      %v518 = vsub.f32 %v508, %v515
      %v519 = vsub.f32 %v511, %v517
      %v520 = vmul.f32 %v518, 1.442695
      %v521 = vpow.pop %v520
      %v522 = vmul.f32 %v519, 1.442695
      %v523 = vpow.pop %v522
      %524 = vadd.xlane.f32.xlu0 %v521
      %v525 = vpop.xlane.xlu0 %524
      %526 = vadd.xlane.f32.xlu0 %v523
      %v527 = vpop.xlane.xlu0 %526
      %v528 = vlog2.pop %v525
      %v529 = vmul.f32 %v528, 0.6931472
      %v530 = vlog2.pop %v527
      %v531 = vmul.f32 %v530, 0.6931472
      %v532 = vsub.f32 %v518, %v529
      %v533 = vsub.f32 %v519, %v531
      %534 = vst [vmem:[%s246] sm:$0xff] %v532
      %535 = vst [vmem:[%s246 + $0x8] sm:$0xff] %v533
      %s536 = smul.u32 2, %s21
      %p537 = scmp.lt.s32.totalorder %s20, 1
      %s538 = scalar_select %p537, %s20, 1
      %p539 = scmp.lt.s32.totalorder %s536, 1
      %s540 = scalar_select %p539, %s536, 1
      %s541 = smul.addr %s538, 2
      %s542 = sadd.s32 %s540, %s541
      %s543 = smul.addr %s542, 8
      %s544 = scalar_lea.vmem %s5, %s543
      // Predicated region
      $region41: #{feedforward_classifier_forward.1} parent=39 // pred_check
        %p545 = pneg %p158
      $region42: #{feedforward_classifier_forward.1} parent=39 // pred_check_branch
        %547 = sbr.rel (%p545) target = $region44
      $region43: #{feedforward_classifier_forward.1} parent=39 // pred_region
        %s548 = smul.u32 2, %s21
      $region44: #{feedforward_classifier_forward.1} parent=39 // pred_fallthru
        _
    $region40: #{feedforward_classifier_forward.1} parent=5 // pred_fallthru
      _
    %p549 = scmp.le.s32.totalorder 2, %s11
    // Predicated region
    $region45: #{feedforward_classifier_forward.1} parent=5 // pred_check
      %p550 = pneg %p549
    $region46: #{feedforward_classifier_forward.1} parent=5 // pred_check_branch
      %552 = sbr.rel (%p550) target = $region48
    $region47: #{feedforward_classifier_forward.1} parent=5 // pred_region
      %s553 = ssub.s32 %s11, 2
      // Predicated region
      $region49: #{feedforward_classifier_forward.1} parent=47 // pred_check
        %p554 = pneg %p164
      $region50: #{feedforward_classifier_forward.1} parent=47 // pred_check_branch
        %556 = sbr.rel (%p554) target = $region52
      $region51: #{feedforward_classifier_forward.1} parent=47 // pred_region
        %s557 = smul.u32 2, %s23
        %p558 = scmp.lt.s32.totalorder %s22, 1
        %s559 = scalar_select %p558, %s22, 1
        %p560 = scmp.lt.s32.totalorder %s557, 1
        %s561 = scalar_select %p560, %s557, 1
        %s562 = smul.addr %s559, 2
        %s563 = sadd.s32 %s561, %s562
        %s564 = smul.addr %s563, 8
        %s565 = scalar_lea.vmem %s5, %s564
      $region52: #{feedforward_classifier_forward.1} parent=47 // pred_fallthru
        _
    $region48: #{feedforward_classifier_forward.1} parent=5 // pred_fallthru
      _
  $region6: #{feedforward_classifier_forward.1} parent=0 // loop_footer
    %s15 = sadd.s32 1, %s11
  $region7: #{feedforward_classifier_forward.1} parent=0 // loop_footer_branch
    %10 = sbr.rel target = $region3
  $region8: #{feedforward_classifier_forward.1} parent=0 // loop_exit
    _

</llo_original>
